<compile_context>
chip_gen: v7x
topology: tpu7x:2x2x1
jax: 0.10.0
libtpu: 0.0.40
codegen_flags: <defaults>
</compile_context>

<pallas_src>
import functools

import jax
import jax.numpy as jnp
from jax.experimental import pallas as pl
from jax.experimental.pallas import tpu as pltpu

INPUT_SIZE = 16
HIDDEN_LAYERS = [32, 32]
OUTPUT_SIZE = 3


def pokernet_kernel(xT_ref, w0t_ref, b0t_ref, w1t_ref, b1t_ref, w2t_ref, b2t_ref,
                    outT_ref):
    # Layer 1: (32,16) @ (16,tb) -> (32,tb), f32 accumulate; bias + ReLU in f32.
    h = jnp.dot(w0t_ref[...], xT_ref[...], preferred_element_type=jnp.float32)
    h = jnp.maximum(h + b0t_ref[...], 0.0)

    # Layer 2: (32,32) @ (32,tb) -> (32,tb). Cast activation to bf16 only for the MXU.
    h = jnp.dot(w1t_ref[...], h.astype(jnp.bfloat16),
                preferred_element_type=jnp.float32)
    h = jnp.maximum(h + b1t_ref[...], 0.0)

    # Output layer: (3,32) @ (32,tb) -> logits^T (3, tb) in f32.
    logits = jnp.dot(w2t_ref[...], h.astype(jnp.bfloat16),
                     preferred_element_type=jnp.float32)
    logits = logits + b2t_ref[...]

    # Head (transposed layout; all ops are lane-dense):
    #   row 0: sigmoid(fold)
    #   rows 1,2: softmax([call, raise]) = [sigmoid(call-raise), sigmoid(raise-call)]
    fold = logits[0:1, :]
    call = logits[1:2, :]
    rais = logits[2:3, :]
    arg = jnp.concatenate([fold, call - rais, rais - call], axis=0)  # (3, tb)
    outT_ref[...] = jax.nn.sigmoid(arg).astype(outT_ref.dtype)


def _round_up(a, m):
    return ((a + m - 1) // m) * m


def _choose_tile(B, block_batch):
    """Batch tile on the lane axis: multiple of 256, >= 2 grid steps for large B."""
    if B < 256:
        return B  # single full-extent block (block dims == array dims -> always legal)
    target = max(256, _round_up(pl.cdiv(B, 8), 256))  # aim for ~8 grid steps
    return min(block_batch, target)


def prepare_params(params):
    """One-time (out-of-hot-path) prep: transpose weights to (out,in) bf16,
    biases to (out,1) f32."""
    prep = []
    for (w, b) in params:
        prep.append((jnp.transpose(w).astype(jnp.bfloat16),
                     jnp.reshape(b, (b.shape[-1], 1)).astype(jnp.float32)))
    return tuple(prep)


def pokernet_forward(x, prep, block_batch=4096):
    """x: (B, INPUT_SIZE) float32. prep: output of prepare_params()."""
    (w0t, b0t), (w1t, b1t), (w2t, b2t) = prep
    B = x.shape[0]
    tb = _choose_tile(B, block_batch)
    grid = (pl.cdiv(B, tb),)

    # Single wrapper op: transpose fused with the bf16 cast (lane-dense kernel input).
    xT = jnp.transpose(x).astype(jnp.bfloat16)  # (INPUT_SIZE, B)

    const = lambda a: pl.BlockSpec(a.shape, lambda i: (0, 0))  # VMEM-resident operands

    outT = pl.pallas_call(
        pokernet_kernel,
        out_shape=jax.ShapeDtypeStruct((OUTPUT_SIZE, B), jnp.float32),
        grid=grid,
        in_specs=[
            pl.BlockSpec((INPUT_SIZE, tb), lambda i: (0, i)),  # batch-tiled x^T
            const(w0t), const(b0t),
            const(w1t), const(b1t),
            const(w2t), const(b2t),
        ],
        out_specs=pl.BlockSpec((OUTPUT_SIZE, tb), lambda i: (0, i)),  # lane-dense output
        compiler_params=pltpu.CompilerParams(dimension_semantics=("parallel",)),
    )(xT, w0t, b0t, w1t, b1t, w2t, b2t)

    return jnp.transpose(outT)  # (B, OUTPUT_SIZE)


def init_params(key):
    """Deterministic init mimicking PyTorch nn.Linear default:
    U(-1/sqrt(fan_in), 1/sqrt(fan_in)).  Returns f32 (W:(in,out), b:(1,out))."""
    sizes = [INPUT_SIZE] + HIDDEN_LAYERS + [OUTPUT_SIZE]
    params = []
    for fan_in, fan_out in zip(sizes[:-1], sizes[1:]):
        key, kw, kb = jax.random.split(key, 3)
        bound = 1.0 / jnp.sqrt(jnp.float32(fan_in))
        w = jax.random.uniform(kw, (fan_in, fan_out), jnp.float32, -bound, bound)
        b = jax.random.uniform(kb, (1, fan_out), jnp.float32, -bound, bound)
        params.append((w, b))
    return params


def reference_forward(x, params):
    """Pure-JAX f32 reference of the PyTorch forward."""
    h = x
    for (w, b) in params[:-1]:
        h = jax.nn.relu(h @ w + b)
    logits = h @ params[-1][0] + params[-1][1]
    fold = jax.nn.sigmoid(logits[:, 0:1])
    cr = jax.nn.softmax(logits[:, 1:], axis=1)
    return jnp.concatenate([fold, cr], axis=1)


if __name__ == "__main__":
    key = jax.random.PRNGKey(0)
    key, kx = jax.random.split(key)
    params = init_params(key)
    prep = prepare_params(params)  # one-time weight transpose + bf16 cast

    fwd = jax.jit(pokernet_forward, static_argnames=("block_batch",))

    # Small check (single full-extent block, B < 256 path).
    B = 2
    x = jax.random.normal(kx, (B, INPUT_SIZE), jnp.float32)
    out = jax.block_until_ready(fwd(x, prep))
    ref = reference_forward(x, params)
    assert out.shape == (B, OUTPUT_SIZE)
    # Tolerance relaxed for bf16 matmul inputs (f32 accumulation).
    assert jnp.allclose(out, ref, atol=5e-3, rtol=5e-3), (out, ref)

    # Multi-step grid + remainder check: B not a multiple of tb exercises the
    # partial last block and the batch-tiled / resident-weight pipelining.
    key, kx2 = jax.random.split(key)
    B2 = 1000
    x2 = jax.random.normal(kx2, (B2, INPUT_SIZE), jnp.float32)
    out2 = jax.block_until_ready(fwd(x2, prep, block_batch=256))  # grid of 4 steps
    ref2 = reference_forward(x2, params)
    assert out2.shape == (B2, OUTPUT_SIZE)
    assert jnp.allclose(out2, ref2, atol=5e-3, rtol=5e-3)

    print("KERNEL_OK")
</pallas_src>

<mosaic_0001>
module attributes {stable_mosaic.version = 11 : i64} {
  func.func @pokernet_kernel(%arg0: i32, %arg1: memref<16x2xbf16, #tpu.memory_space<vmem>>, %arg2: memref<32x16xbf16, #tpu.memory_space<vmem>>, %arg3: memref<32x1xf32, #tpu.memory_space<vmem>>, %arg4: memref<32x32xbf16, #tpu.memory_space<vmem>>, %arg5: memref<32x1xf32, #tpu.memory_space<vmem>>, %arg6: memref<3x32xbf16, #tpu.memory_space<vmem>>, %arg7: memref<3x1xf32, #tpu.memory_space<vmem>>, %arg8: memref<3x2xf32, #tpu.memory_space<vmem>>) attributes {dimension_semantics = [#tpu.dimension_semantics<parallel>], iteration_bounds = array<i64: 1>, scalar_prefetch = 0 : i64, scratch_operands = 0 : i64, tpu.core_type = #tpu.core_type<tc>, window_params = [{transform_indices = @transform_0, window_bounds = array<i64: 16, 2>}, {pipeline_mode = #tpu.pipeline_mode<synchronous>, transform_indices = @transform_1, window_bounds = array<i64: 32, 16>}, {pipeline_mode = #tpu.pipeline_mode<synchronous>, transform_indices = @transform_2, window_bounds = array<i64: 32, 1>}, {pipeline_mode = #tpu.pipeline_mode<synchronous>, transform_indices = @transform_3, window_bounds = array<i64: 32, 32>}, {pipeline_mode = #tpu.pipeline_mode<synchronous>, transform_indices = @transform_4, window_bounds = array<i64: 32, 1>}, {pipeline_mode = #tpu.pipeline_mode<synchronous>, transform_indices = @transform_5, window_bounds = array<i64: 3, 32>}, {pipeline_mode = #tpu.pipeline_mode<synchronous>, transform_indices = @transform_6, window_bounds = array<i64: 3, 1>}, {transform_indices = @transform_7, window_bounds = array<i64: 3, 2>}]} {
    %c0 = arith.constant 0 : index
    %c0_0 = arith.constant 0 : index
    %0 = vector.load %arg2[%c0, %c0_0] : memref<32x16xbf16, #tpu.memory_space<vmem>>, vector<32x16xbf16>
    %c0_1 = arith.constant 0 : index
    %c0_2 = arith.constant 0 : index
    %1 = vector.load %arg1[%c0_1, %c0_2] : memref<16x2xbf16, #tpu.memory_space<vmem>>, vector<16x2xbf16>
    %cst = arith.constant dense<0.000000e+00> : vector<32x2xf32>
    %2 = tpu.matmul %0, %1, %cst {dimension_numbers = #tpu.dot_dimension_numbers<[1], [0], [0], [1], [0, 0, 1, 1], [], []>} : vector<32x16xbf16>, vector<16x2xbf16>, vector<32x2xf32> -> vector<32x2xf32>
    %c0_3 = arith.constant 0 : index
    %c0_4 = arith.constant 0 : index
    %3 = vector.load %arg3[%c0_3, %c0_4] : memref<32x1xf32, #tpu.memory_space<vmem>>, vector<32x1xf32>
    %4 = vector.broadcast %3 : vector<32x1xf32> to vector<32x2xf32>
    %5 = arith.addf %2, %4 : vector<32x2xf32>
    %cst_5 = arith.constant 0.000000e+00 : f32
    %6 = vector.broadcast %cst_5 : f32 to vector<32x2xf32>
    %7 = arith.maximumf %5, %6 : vector<32x2xf32>
    %c0_6 = arith.constant 0 : index
    %c0_7 = arith.constant 0 : index
    %8 = vector.load %arg4[%c0_6, %c0_7] : memref<32x32xbf16, #tpu.memory_space<vmem>>, vector<32x32xbf16>
    %9 = arith.truncf %7 : vector<32x2xf32> to vector<32x2xbf16>
    %cst_8 = arith.constant dense<0.000000e+00> : vector<32x2xf32>
    %10 = tpu.matmul %8, %9, %cst_8 {dimension_numbers = #tpu.dot_dimension_numbers<[1], [0], [0], [1], [0, 0, 1, 1], [], []>} : vector<32x32xbf16>, vector<32x2xbf16>, vector<32x2xf32> -> vector<32x2xf32>
    %c0_9 = arith.constant 0 : index
    %c0_10 = arith.constant 0 : index
    %11 = vector.load %arg5[%c0_9, %c0_10] : memref<32x1xf32, #tpu.memory_space<vmem>>, vector<32x1xf32>
    %12 = vector.broadcast %11 : vector<32x1xf32> to vector<32x2xf32>
    %13 = arith.addf %10, %12 : vector<32x2xf32>
    %cst_11 = arith.constant 0.000000e+00 : f32
    %14 = vector.broadcast %cst_11 : f32 to vector<32x2xf32>
    %15 = arith.maximumf %13, %14 : vector<32x2xf32>
    %c0_12 = arith.constant 0 : index
    %c0_13 = arith.constant 0 : index
    %16 = vector.load %arg6[%c0_12, %c0_13] : memref<3x32xbf16, #tpu.memory_space<vmem>>, vector<3x32xbf16>
    %17 = arith.truncf %15 : vector<32x2xf32> to vector<32x2xbf16>
    %cst_14 = arith.constant dense<0.000000e+00> : vector<3x2xf32>
    %18 = tpu.matmul %16, %17, %cst_14 {dimension_numbers = #tpu.dot_dimension_numbers<[1], [0], [0], [1], [0, 0, 1, 1], [], []>} : vector<3x32xbf16>, vector<32x2xbf16>, vector<3x2xf32> -> vector<3x2xf32>
    %c0_15 = arith.constant 0 : index
    %c0_16 = arith.constant 0 : index
    %19 = vector.load %arg7[%c0_15, %c0_16] : memref<3x1xf32, #tpu.memory_space<vmem>>, vector<3x1xf32>
    %20 = vector.broadcast %19 : vector<3x1xf32> to vector<3x2xf32>
    %21 = arith.addf %18, %20 : vector<3x2xf32>
    %22 = vector.extract_strided_slice %21 {offsets = [0, 0], sizes = [1, 2], strides = [1, 1]} : vector<3x2xf32> to vector<1x2xf32>
    %23 = vector.extract_strided_slice %21 {offsets = [1, 0], sizes = [1, 2], strides = [1, 1]} : vector<3x2xf32> to vector<1x2xf32>
    %24 = vector.extract_strided_slice %21 {offsets = [2, 0], sizes = [1, 2], strides = [1, 1]} : vector<3x2xf32> to vector<1x2xf32>
    %25 = arith.subf %23, %24 : vector<1x2xf32>
    %26 = arith.subf %24, %23 : vector<1x2xf32>
    %27 = tpu.concatenate %22, %25, %26 in 0 : vector<1x2xf32>, vector<1x2xf32>, vector<1x2xf32> -> vector<3x2xf32>
    %28 = arith.negf %27 : vector<3x2xf32>
    %29 = math.exp %28 : vector<3x2xf32>
    %cst_17 = arith.constant 1.000000e+00 : f32
    %30 = vector.broadcast %cst_17 : f32 to vector<3x2xf32>
    %31 = arith.addf %30, %29 : vector<3x2xf32>
    %32 = arith.divf %30, %31 : vector<3x2xf32>
    %c0_18 = arith.constant 0 : index
    %c0_19 = arith.constant 0 : index
    %33 = vector.load %arg8[%c0_18, %c0_19] : memref<3x2xf32, #tpu.memory_space<vmem>>, vector<3x2xf32>
    tpu.vector_store %arg8[%c0_18, %c0_19], %32 {strides = array<i32>} : memref<3x2xf32, #tpu.memory_space<vmem>>, vector<3x2xf32>,
    return
  }
  func.func @transform_0(%arg0: i32) -> (i32, i32) {
    %c0_i32 = arith.constant 0 : i32
    %c0_i32_0 = arith.constant 0 : i32
    return %c0_i32, %arg0 : i32, i32
  }
  func.func @transform_1(%arg0: i32) -> (i32, i32) {
    %c0_i32 = arith.constant 0 : i32
    %c0_i32_0 = arith.constant 0 : i32
    %c0_i32_1 = arith.constant 0 : i32
    return %c0_i32, %c0_i32_0 : i32, i32
  }
  func.func @transform_2(%arg0: i32) -> (i32, i32) {
    %c0_i32 = arith.constant 0 : i32
    %c0_i32_0 = arith.constant 0 : i32
    %c0_i32_1 = arith.constant 0 : i32
    return %c0_i32, %c0_i32_0 : i32, i32
  }
  func.func @transform_3(%arg0: i32) -> (i32, i32) {
    %c0_i32 = arith.constant 0 : i32
    %c0_i32_0 = arith.constant 0 : i32
    %c0_i32_1 = arith.constant 0 : i32
    return %c0_i32, %c0_i32_0 : i32, i32
  }
  func.func @transform_4(%arg0: i32) -> (i32, i32) {
    %c0_i32 = arith.constant 0 : i32
    %c0_i32_0 = arith.constant 0 : i32
    %c0_i32_1 = arith.constant 0 : i32
    return %c0_i32, %c0_i32_0 : i32, i32
  }
  func.func @transform_5(%arg0: i32) -> (i32, i32) {
    %c0_i32 = arith.constant 0 : i32
    %c0_i32_0 = arith.constant 0 : i32
    %c0_i32_1 = arith.constant 0 : i32
    return %c0_i32, %c0_i32_0 : i32, i32
  }
  func.func @transform_6(%arg0: i32) -> (i32, i32) {
    %c0_i32 = arith.constant 0 : i32
    %c0_i32_0 = arith.constant 0 : i32
    %c0_i32_1 = arith.constant 0 : i32
    return %c0_i32, %c0_i32_0 : i32, i32
  }
  func.func @transform_7(%arg0: i32) -> (i32, i32) {
    %c0_i32 = arith.constant 0 : i32
    %c0_i32_0 = arith.constant 0 : i32
    return %c0_i32, %arg0 : i32, i32
  }
}

</mosaic_0001>

<llo_original>
// kernel: pokernet_forward.1
$region0: #{pokernet_forward.1}
  #allocation0 [shape = 'u32[]', space=smem, size = 0x4, offset = 0x4, fixed_abs, tag = 'smem constant byte address 0x4 - core index']
  #allocation1 [shape = 'u32[144,128]{1,0:T(1,128)}', space=vmem, size = 0x12000, scoped, tag = 'internal scratch']
  %s0 = inlined_call_operand.vmem [shape: bf16[16,2], index: 0, kind: input, shape index: {}]
  %s1 = inlined_call_operand.vmem [shape: bf16[32,16], index: 1, kind: input, shape index: {}]
  %s2 = inlined_call_operand.vmem [shape: f32[32,1], index: 2, kind: input, shape index: {}]
  %s3 = inlined_call_operand.vmem [shape: bf16[32,32], index: 3, kind: input, shape index: {}]
  %s4 = inlined_call_operand.vmem [shape: f32[32,1], index: 4, kind: input, shape index: {}]
  %s5 = inlined_call_operand.vmem [shape: bf16[3,32], index: 5, kind: input, shape index: {}]
  %s6 = inlined_call_operand.vmem [shape: f32[3,1], index: 6, kind: input, shape index: {}]
  %s7 = inlined_call_operand.vmem [shape: f32[3,2], index: 7, kind: output, shape index: {}]
  %s8 = sld [smem:[#allocation0]]
  $region38: #{pokernet_forward.1} parent=0
    _
  %s10 = ssub.s32 1, %s8
  %s11 = scalar_select 0, %s10, %s8
  // Predicated region
  $region2: #{pokernet_forward.1} parent=0 // pred_check
    _
  $region3: #{pokernet_forward.1} parent=0 // pred_check_branch
    %13 = sbr.rel (0) target = $region5
  $region4: #{pokernet_forward.1} parent=0 // pred_region
    _
  $region5: #{pokernet_forward.1} parent=0 // pred_fallthru
    _
  // Predicated region
  $region6: #{pokernet_forward.1} parent=0 // pred_check
    _
  $region7: #{pokernet_forward.1} parent=0 // pred_check_branch
    %15 = sbr.rel (0) target = $region9
  $region8: #{pokernet_forward.1} parent=0 // pred_region
    _
  $region9: #{pokernet_forward.1} parent=0 // pred_fallthru
    _
  // Predicated region
  $region10: #{pokernet_forward.1} parent=0 // pred_check
    _
  $region11: #{pokernet_forward.1} parent=0 // pred_check_branch
    %17 = sbr.rel (0) target = $region13
  $region12: #{pokernet_forward.1} parent=0 // pred_region
    _
  $region13: #{pokernet_forward.1} parent=0 // pred_fallthru
    _
  // Predicated region
  $region14: #{pokernet_forward.1} parent=0 // pred_check
    _
  $region15: #{pokernet_forward.1} parent=0 // pred_check_branch
    %19 = sbr.rel (0) target = $region17
  $region16: #{pokernet_forward.1} parent=0 // pred_region
    _
  $region17: #{pokernet_forward.1} parent=0 // pred_fallthru
    _
  // Predicated region
  $region18: #{pokernet_forward.1} parent=0 // pred_check
    _
  $region19: #{pokernet_forward.1} parent=0 // pred_check_branch
    %21 = sbr.rel (0) target = $region21
  $region20: #{pokernet_forward.1} parent=0 // pred_region
    _
  $region21: #{pokernet_forward.1} parent=0 // pred_fallthru
    _
  // Predicated region
  $region22: #{pokernet_forward.1} parent=0 // pred_check
    _
  $region23: #{pokernet_forward.1} parent=0 // pred_check_branch
    %23 = sbr.rel (0) target = $region25
  $region24: #{pokernet_forward.1} parent=0 // pred_region
    _
  $region25: #{pokernet_forward.1} parent=0 // pred_fallthru
    _
  // Predicated region
  $region26: #{pokernet_forward.1} parent=0 // pred_check
    _
  $region27: #{pokernet_forward.1} parent=0 // pred_check_branch
    %25 = sbr.rel (0) target = $region29
  $region28: #{pokernet_forward.1} parent=0 // pred_region
    _
  $region29: #{pokernet_forward.1} parent=0 // pred_fallthru
    _
  %v27 = vld [vmem:[%s1] sm:$0xf]
  %v28 = vld [vmem:[%s1 + $0x4] sm:$0xf]
  %v29 = vld [vmem:[%s1 + $0x8] sm:$0xf]
  %v30 = vld [vmem:[%s1 + $0xc] sm:$0xf]
  %v31 = vld [vmem:[%s0] sm:$0xf]
  %v32 = vld [vmem:[%s0 + $0x4] sm:$0xf]
  %v33 = vld [vmem:[%s2] sm:$0xff]
  %v34 = vld [vmem:[%s2 + $0x8] sm:$0xff]
  %v35 = vld [vmem:[%s2 + $0x10] sm:$0xff]
  %v36 = vld [vmem:[%s2 + $0x18] sm:$0xff]
  %38 = vset.pattern.permute.xlu0 0
  %39 = vperm.xlu0 %38, %v33
  %v40 = vpop.permute.xlu0 %39
  %43 = vset.pattern.permute.xlu0 0
  %44 = vperm.xlu0 %43, %v34
  %v45 = vpop.permute.xlu0 %44
  %48 = vset.pattern.permute.xlu0 0
  %49 = vperm.xlu0 %48, %v35
  %v50 = vpop.permute.xlu0 %49
  %53 = vset.pattern.permute.xlu0 0
  %54 = vperm.xlu0 %53, %v36
  %v55 = vpop.permute.xlu0 %54
  %v61 = vunpack.c.l.b16 %v27
  %v62 = vunpack.c.l.b16 %v28
  %v63 = vunpack.c.l.b16 %v29
  %v64 = vunpack.c.l.b16 %v30
  %v65 = vpack.c.b16 %v62, %v61
  %v66 = vpack.c.b16 %v64, %v63
  %v69 = vunpack.c.l.b16 %v31
  %v70 = vunpack.c.l.b16 %v32
  %v71 = vpack.c.b16 %v70, %v69
  %vm73 = vcmask 130048
  %v75 = vsel %vm73, %v65, 0
  %v78 = vsel %vm73, %v66, 0
  %80 = vmatprep.subr.bf16.mxu0 0
  %81 = vmatpush1.bf16.msra.mxu0 %v71
  %82 = vmatprep.subr.bf16.mxu0 0
  %83 = vmatpush1.bf16.msra.mxu0 0
  %84 = vmatprep.subr.bf16.mxu0 0
  %85 = vmatpush1.bf16.msra.mxu0 0
  %86 = vmatprep.subr.bf16.mxu0 0
  %87 = vmatpush1.bf16.msra.mxu0 0
  %88 = vmatprep.subr.bf16.mxu0 0
  %89 = vmatpush1.bf16.msra.mxu0 0
  %90 = vmatprep.subr.bf16.mxu0 0
  %91 = vmatpush1.bf16.msra.mxu0 0
  %92 = vmatprep.subr.bf16.mxu0 0
  %93 = vmatpush1.bf16.msra.mxu0 0
  %94 = vmatprep.subr.bf16.mxu0 0
  %95 = vmatpush1.bf16.msra.mxu0 0
  %96 = vmatprep.subr.bf16.mxu0 0
  %97 = vmatpush1.bf16.msra.mxu0 0
  %98 = vmatprep.subr.bf16.mxu0 0
  %99 = vmatpush1.bf16.msra.mxu0 0
  %100 = vmatprep.subr.bf16.mxu0 0
  %101 = vmatpush1.bf16.msra.mxu0 0
  %102 = vmatprep.subr.bf16.mxu0 0
  %103 = vmatpush1.bf16.msra.mxu0 0
  %104 = vmatprep.subr.bf16.mxu0 0
  %105 = vmatpush1.bf16.msra.mxu0 0
  %106 = vmatprep.subr.bf16.mxu0 0
  %107 = vmatpush1.bf16.msra.mxu0 0
  %108 = vmatprep.subr.bf16.mxu0 0
  %109 = vmatpush1.bf16.msra.mxu0 0
  %110 = vmatprep.subr.bf16.mxu0 0
  %111 = vmatpush1.bf16.msra.mxu0 0
  %112 = vmatprep.mubr.bf16.mxu0 0
  %113 = vmatmul.mubr.bf16.gmra.mrb[0].mxu0 %v75
  %v114 = vpop.f32.mrb[0].mxu0
  %v115 = vadd.f32 %v40, %v114
  %v116 = vpop.f32.mrb[0].mxu0
  %v117 = vpop.f32.mrb[0].mxu0
  %v118 = vadd.f32 %v45, %v117
  %v119 = vpop.f32.mrb[0].mxu0
  %120 = vmatprep.mubr.bf16.mxu0 0
  %121 = vmatmul.mubr.bf16.gmra.mrb[0].mxu0 %v78
  %v122 = vpop.f32.mrb[0].mxu0
  %v123 = vadd.f32 %v50, %v122
  %v124 = vpop.f32.mrb[0].mxu0
  %v125 = vpop.f32.mrb[0].mxu0
  %v126 = vadd.f32 %v55, %v125
  %v127 = vpop.f32.mrb[0].mxu0
  %128 = vdwg.mxu0
  %v129 = vmax.f32 %v115, 0.0
  %v130 = vmax.f32 %v118, 0.0
  %v131 = vmax.f32 %v123, 0.0
  %v132 = vmax.f32 %v126, 0.0
  %v133 = vld [vmem:[%s3] sm:$0xf]
  %v134 = vld [vmem:[%s3 + $0x4] sm:$0xf]
  %v135 = vld [vmem:[%s3 + $0x8] sm:$0xf]
  %v136 = vld [vmem:[%s3 + $0xc] sm:$0xf]
  %v137 = vpack.c.bf16 %v130, %v129
  %v138 = vpack.c.bf16 %v132, %v131
  %v139 = vld [vmem:[%s4] sm:$0xff]
  %v140 = vld [vmem:[%s4 + $0x8] sm:$0xff]
  %v141 = vld [vmem:[%s4 + $0x10] sm:$0xff]
  %v142 = vld [vmem:[%s4 + $0x18] sm:$0xff]
  %144 = vset.pattern.permute.xlu0 0
  %145 = vperm.xlu0 %144, %v139
  %v146 = vpop.permute.xlu0 %145
  %149 = vset.pattern.permute.xlu0 0
  %150 = vperm.xlu0 %149, %v140
  %v151 = vpop.permute.xlu0 %150
  %154 = vset.pattern.permute.xlu0 0
  %155 = vperm.xlu0 %154, %v141
  %v156 = vpop.permute.xlu0 %155
  %159 = vset.pattern.permute.xlu0 0
  %160 = vperm.xlu0 %159, %v142
  %v161 = vpop.permute.xlu0 %160
  %v167 = vunpack.c.l.b16 %v133
  %v168 = vunpack.c.l.b16 %v134
  %v169 = vunpack.c.l.b16 %v135
  %v170 = vunpack.c.l.b16 %v136
  %v171 = vpack.c.b16 %v168, %v167
  %v172 = vpack.c.b16 %v170, %v169
  %vm173 = vcmask 261120
  %v175 = vsel %vm173, %v171, 0
  %v178 = vsel %vm173, %v172, 0
  %180 = vmatprep.subr.bf16.mxu0 0
  %181 = vmatpush1.bf16.msra.mxu0 %v137
  %182 = vmatprep.subr.bf16.mxu0 0
  %183 = vmatpush1.bf16.msra.mxu0 %v138
  %184 = vmatprep.subr.bf16.mxu0 0
  %185 = vmatpush1.bf16.msra.mxu0 0
  %186 = vmatprep.subr.bf16.mxu0 0
  %187 = vmatpush1.bf16.msra.mxu0 0
  %188 = vmatprep.subr.bf16.mxu0 0
  %189 = vmatpush1.bf16.msra.mxu0 0
  %190 = vmatprep.subr.bf16.mxu0 0
  %191 = vmatpush1.bf16.msra.mxu0 0
  %192 = vmatprep.subr.bf16.mxu0 0
  %193 = vmatpush1.bf16.msra.mxu0 0
  %194 = vmatprep.subr.bf16.mxu0 0
  %195 = vmatpush1.bf16.msra.mxu0 0
  %196 = vmatprep.subr.bf16.mxu0 0
  %197 = vmatpush1.bf16.msra.mxu0 0
  %198 = vmatprep.subr.bf16.mxu0 0
  %199 = vmatpush1.bf16.msra.mxu0 0
  %200 = vmatprep.subr.bf16.mxu0 0
  %201 = vmatpush1.bf16.msra.mxu0 0
  %202 = vmatprep.subr.bf16.mxu0 0
  %203 = vmatpush1.bf16.msra.mxu0 0
  %204 = vmatprep.subr.bf16.mxu0 0
  %205 = vmatpush1.bf16.msra.mxu0 0
  %206 = vmatprep.subr.bf16.mxu0 0
  %207 = vmatpush1.bf16.msra.mxu0 0
  %208 = vmatprep.subr.bf16.mxu0 0
  %209 = vmatpush1.bf16.msra.mxu0 0
  %210 = vmatprep.subr.bf16.mxu0 0
  %211 = vmatpush1.bf16.msra.mxu0 0
  %212 = vmatprep.mubr.bf16.mxu0 0
  %213 = vmatmul.mubr.bf16.gmra.mrb[0].mxu0 %v175
  %v214 = vpop.f32.mrb[0].mxu0
  %v215 = vadd.f32 %v146, %v214
  %v216 = vpop.f32.mrb[0].mxu0
  %v217 = vpop.f32.mrb[0].mxu0
  %v218 = vadd.f32 %v151, %v217
  %v219 = vpop.f32.mrb[0].mxu0
  %220 = vmatprep.mubr.bf16.mxu0 0
  %221 = vmatmul.mubr.bf16.gmra.mrb[0].mxu0 %v178
  %v222 = vpop.f32.mrb[0].mxu0
  %v223 = vadd.f32 %v156, %v222
  %v224 = vpop.f32.mrb[0].mxu0
  %v225 = vpop.f32.mrb[0].mxu0
  %v226 = vadd.f32 %v161, %v225
  %v227 = vpop.f32.mrb[0].mxu0
  %228 = vdwg.mxu0
  %v229 = vmax.f32 %v215, 0.0
  %v230 = vmax.f32 %v218, 0.0
  %v231 = vmax.f32 %v223, 0.0
  %v232 = vmax.f32 %v226, 0.0
  %v233 = vld [vmem:[%s5] sm:$0x3]
  %v234 = vpack.c.bf16 %v230, %v229
  %v235 = vpack.c.bf16 %v232, %v231
  %v236 = vld [vmem:[%s6] sm:$0x7]
  %238 = vset.pattern.permute.xlu0 0
  %239 = vperm.xlu0 %238, %v236
  %v240 = vpop.permute.xlu0 %239
  %v243 = vsel %vm173, %v233, 0
  %245 = vmatprep.subr.bf16.mxu0 0
  %246 = vmatpush1.bf16.msra.mxu0 %v234
  %247 = vmatprep.subr.bf16.mxu0 0
  %248 = vmatpush1.bf16.msra.mxu0 %v235
  %249 = vmatprep.subr.bf16.mxu0 0
  %250 = vmatpush1.bf16.msra.mxu0 0
  %251 = vmatprep.subr.bf16.mxu0 0
  %252 = vmatpush1.bf16.msra.mxu0 0
  %253 = vmatprep.subr.bf16.mxu0 0
  %254 = vmatpush1.bf16.msra.mxu0 0
  %255 = vmatprep.subr.bf16.mxu0 0
  %256 = vmatpush1.bf16.msra.mxu0 0
  %257 = vmatprep.subr.bf16.mxu0 0
  %258 = vmatpush1.bf16.msra.mxu0 0
  %259 = vmatprep.subr.bf16.mxu0 0
  %260 = vmatpush1.bf16.msra.mxu0 0
  %261 = vmatprep.subr.bf16.mxu0 0
  %262 = vmatpush1.bf16.msra.mxu0 0
  %263 = vmatprep.subr.bf16.mxu0 0
  %264 = vmatpush1.bf16.msra.mxu0 0
  %265 = vmatprep.subr.bf16.mxu0 0
  %266 = vmatpush1.bf16.msra.mxu0 0
  %267 = vmatprep.subr.bf16.mxu0 0
  %268 = vmatpush1.bf16.msra.mxu0 0
  %269 = vmatprep.subr.bf16.mxu0 0
  %270 = vmatpush1.bf16.msra.mxu0 0
  %271 = vmatprep.subr.bf16.mxu0 0
  %272 = vmatpush1.bf16.msra.mxu0 0
  %273 = vmatprep.subr.bf16.mxu0 0
  %274 = vmatpush1.bf16.msra.mxu0 0
  %275 = vmatprep.subr.bf16.mxu0 0
  %276 = vmatpush1.bf16.msra.mxu0 0
  %277 = vmatprep.mubr.bf16.mxu0 0
  %278 = vmatmul.mubr.bf16.gmra.mrb[0].mxu0 %v243
  %v279 = vpop.f32.mrb[0].mxu0
  %v280 = vadd.f32 %v240, %v279
  %v281 = vpop.f32.mrb[0].mxu0
  %v282 = vpop.f32.mrb[0].mxu0
  %v283 = vpop.f32.mrb[0].mxu0
  %284 = vdwg.mxu0
  %v286 = vrot.slane %v280, 1
  %v288 = vsub.f32 %v280, %v286
  %v289 = vrot.slane %v280, 7
  %v291 = vsub.f32 %v280, %v289
  %vm292 = vcmask 1040384
  %v293 = vsel %vm292, %v280, %v288
  %vm294 = vcmask 1041408
  %v295 = vsel %vm294, %v293, %v291
  %v296 = vxor.u32 %v295, 2147483648
  %v297 = vmul.f32 %v296, 1.442695
  %v298 = vpow.pop %v297
  %v299 = vadd.f32 %v298, 1.0
  %v300 = vrcp.pop %v299
  %v301 = vmul.f32 1.0, %v300
  %vm302 = vcmask 10240
  %303 = vst.msk [vmem:[%s7] sm:$0x7] %vm302, %v301
  // Predicated region
  $region30: #{pokernet_forward.1} parent=0 // pred_check
    _
  $region31: #{pokernet_forward.1} parent=0 // pred_check_branch
    %305 = sbr.rel (0) target = $region33
  $region32: #{pokernet_forward.1} parent=0 // pred_region
    _
  $region33: #{pokernet_forward.1} parent=0 // pred_fallthru
    _
  // Predicated region
  $region34: #{pokernet_forward.1} parent=0 // pred_check
    _
  $region35: #{pokernet_forward.1} parent=0 // pred_check_branch
    %307 = sbr.rel (0) target = $region37
  $region36: #{pokernet_forward.1} parent=0 // pred_region
    _
  $region37: #{pokernet_forward.1} parent=0 // pred_fallthru
    _

</llo_original>
